<compile_context>
chip_gen: v7x
topology: tpu7x:2x2x1
jax: 0.10.0
libtpu: 0.0.40
codegen_flags: <defaults>
</compile_context>

<pallas_src>
import functools

import jax
import jax.numpy as jnp
from jax.experimental import pallas as pl
from jax.experimental.pallas import tpu as pltpu


def _window_reduce(p, window, m):
    """Sum `window` chunks of width `m` along the lane axis.

    p: (TB, window*m) f32  ->  (TB, m)

    Phase 1: vreg-aligned halving (plain vadds, no data movement).
    Phase 2: cyclic roll tree (pltpu.roll on the XLU); correct for either roll
             direction because the partial sums carry the wrap symmetry and
             only lanes [0, c*m) are read at the next level.
    Phase 3: unaligned-slice adds for any odd remainder (not hit for W=8).
    """
    c = window
    width = c * m
    while c % 2 == 0 and (width // 2) % 128 == 0:
        width //= 2
        c //= 2
        p = p[:, :width] + p[:, width:]
    while c % 2 == 0:
        c //= 2
        p = p + pltpu.roll(p, shift=c * m, axis=1)
    acc = p[:, :m]
    for i in range(1, c):
        acc = acc + p[:, i * m:(i + 1) * m]
    return acc


def _ar_kernel(x_ref, w_ref, b_ref, o_ref, *, window, m, output_fun):
    # x_ref: (TB, W*M) lane-dense tile   w_ref: (1, W*M)   b_ref: (1, M)
    # o_ref: (TB, M)
    p = x_ref[...].astype(jnp.float32) * w_ref[...].astype(jnp.float32)
    y = _window_reduce(p, window, m) + b_ref[...].astype(jnp.float32)
    if output_fun == "sigmoid":
        y = jax.nn.sigmoid(y)
    elif output_fun == "tanh":
        y = jnp.tanh(y)
    o_ref[...] = y.astype(o_ref.dtype)


def _choose_block_rows(batch, block_rows, min_steps):
    # Small batches: one full-extent block (always a legal block shape, even
    # when batch is not a multiple of 8).  Everything here is launch-bound.
    if batch <= 512:
        return batch
    # Large batches: multiple-of-8 tiles sized to give >= min_steps grid steps
    # (pipelining + v7x 2-TensorCore sharding) but as large as practical to
    # amortize per-step overhead.  Ragged last block is masked by Pallas.
    tb = min(block_rows, max(256, batch // min_steps))
    tb = max(8, (min(tb, batch) // 8) * 8)
    return tb


@functools.partial(jax.jit, static_argnames=("output_fun", "block_rows", "min_steps"))
def ar_forward(x, weight, bias, *, output_fun=None, block_rows=2048, min_steps=4):
    """x: (B, W, M); weight: (W, M); bias: (M,).  Returns (B, M)."""
    B, W, M = x.shape
    WM = W * M

    # Free (contiguous) reshapes only -- no transpose / pad HBM passes.
    # NOTE: if W*M is not a multiple of 128 this falls back to a lane-sparse
    # (but still single-pass, correct) layout since WM equals the full dim.
    xflat = x.reshape(B, WM)
    wflat = weight.reshape(1, WM)
    brow = bias.reshape(1, M)

    TB = _choose_block_rows(B, block_rows, min_steps)
    grid = (pl.cdiv(B, TB),)

    # VMEM budget from the actual block footprint (double-buffered x + out),
    # with 2x headroom; floor 32 MiB, cap 48 MiB (safe on v7x 64 MiB physical).
    itemsize = jnp.dtype(x.dtype).itemsize
    need = 2 * TB * WM * itemsize + 2 * TB * M * itemsize + (WM + M) * 4 * 2
    vmem_limit = int(min(max(2 * need, 32 * 1024 * 1024), 48 * 1024 * 1024))

    kernel = functools.partial(_ar_kernel, window=W, m=M, output_fun=output_fun)

    out = pl.pallas_call(
        kernel,
        out_shape=jax.ShapeDtypeStruct((B, M), x.dtype),
        grid_spec=pl.GridSpec(
            grid=grid,
            in_specs=[
                # one large lane-dense batch tile per grid step
                pl.BlockSpec((TB, WM), lambda i: (i, 0)),
                # weight / bias: tiny, same block every step
                pl.BlockSpec((1, WM), lambda i: (0, 0)),
                pl.BlockSpec((1, M), lambda i: (0, 0)),
            ],
            out_specs=pl.BlockSpec((TB, M), lambda i: (i, 0)),
        ),
        compiler_params=pltpu.CompilerParams(
            dimension_semantics=("parallel",),
            vmem_limit_bytes=vmem_limit,
        ),
    )(xflat, wflat, brow)
    return out


def ar_reference(x, weight, bias, *, output_fun=None):
    y = jnp.sum(x * weight[None, :, :], axis=1) + bias[None, :]
    if output_fun == "sigmoid":
        y = jax.nn.sigmoid(y)
    elif output_fun == "tanh":
        y = jnp.tanh(y)
    return y


if __name__ == "__main__":
    # small shapes consistent with the module: window=8, m=32, batch=2
    B, W, M = 2, 8, 32

    key = jax.random.PRNGKey(0)
    kx, kw, kb, kx2, kx3 = jax.random.split(key, 5)

    # deterministic xavier_normal-style init for weight (W, M); bias = zeros
    std = (2.0 / (W + M)) ** 0.5
    weight = std * jax.random.normal(kw, (W, M), dtype=jnp.float32)
    bias = jnp.zeros((M,), dtype=jnp.float32)

    x = jax.random.normal(kx, (B, W, M), dtype=jnp.float32)
    out = jax.block_until_ready(ar_forward(x, weight, bias, output_fun="sigmoid"))
    ref = ar_reference(x, weight, bias, output_fun="sigmoid")
    assert out.shape == (B, M)
    assert jnp.allclose(out, ref, atol=1e-5, rtol=1e-5), "mismatch (small batch)"

    # medium batch: single lane-dense block, non-multiple-of-8 rows
    B2 = 100
    bias2 = 0.1 * jax.random.normal(kb, (M,), dtype=jnp.float32)
    x2 = jax.random.normal(kx2, (B2, W, M), dtype=jnp.float32)
    out2 = jax.block_until_ready(ar_forward(x2, weight, bias2, output_fun="tanh"))
    ref2 = ar_reference(x2, weight, bias2, output_fun="tanh")
    assert out2.shape == (B2, M)
    assert jnp.allclose(out2, ref2, atol=1e-5, rtol=1e-5), "mismatch (medium batch)"

    # larger batch: multi-step grid + ragged last block (masked partial store)
    B3 = 1300
    x3 = jax.random.normal(kx3, (B3, W, M), dtype=jnp.float32)
    out3 = jax.block_until_ready(ar_forward(x3, weight, bias2, output_fun=None))
    ref3 = ar_reference(x3, weight, bias2, output_fun=None)
    assert out3.shape == (B3, M)
    assert jnp.allclose(out3, ref3, atol=1e-5, rtol=1e-5), "mismatch (large batch)"

    print("KERNEL_OK")
</pallas_src>

<mosaic_0001>
module attributes {stable_mosaic.version = 11 : i64} {
  func.func @_ar_kernel(%arg0: i32, %arg1: memref<2x256xf32, #tpu.memory_space<vmem>>, %arg2: memref<1x256xf32, #tpu.memory_space<vmem>>, %arg3: memref<1x32xf32, #tpu.memory_space<vmem>>, %arg4: memref<2x32xf32, #tpu.memory_space<vmem>>) attributes {dimension_semantics = [#tpu.dimension_semantics<parallel>], iteration_bounds = array<i64: 1>, scalar_prefetch = 0 : i64, scratch_operands = 0 : i64, tpu.core_type = #tpu.core_type<tc>, window_params = [{transform_indices = @transform_0, window_bounds = array<i64: 2, 256>}, {pipeline_mode = #tpu.pipeline_mode<synchronous>, transform_indices = @transform_1, window_bounds = array<i64: 1, 256>}, {pipeline_mode = #tpu.pipeline_mode<synchronous>, transform_indices = @transform_2, window_bounds = array<i64: 1, 32>}, {transform_indices = @transform_3, window_bounds = array<i64: 2, 32>}]} {
    %c0 = arith.constant 0 : index
    %c0_0 = arith.constant 0 : index
    %0 = vector.load %arg1[%c0, %c0_0] : memref<2x256xf32, #tpu.memory_space<vmem>>, vector<2x256xf32>
    %c0_1 = arith.constant 0 : index
    %c0_2 = arith.constant 0 : index
    %1 = vector.load %arg2[%c0_1, %c0_2] : memref<1x256xf32, #tpu.memory_space<vmem>>, vector<1x256xf32>
    %2 = vector.broadcast %1 : vector<1x256xf32> to vector<2x256xf32>
    %3 = arith.mulf %0, %2 : vector<2x256xf32>
    %4 = vector.extract_strided_slice %3 {offsets = [0, 0], sizes = [2, 128], strides = [1, 1]} : vector<2x256xf32> to vector<2x128xf32>
    %5 = vector.extract_strided_slice %3 {offsets = [0, 128], sizes = [2, 128], strides = [1, 1]} : vector<2x256xf32> to vector<2x128xf32>
    %6 = arith.addf %4, %5 : vector<2x128xf32>
    %c64_i32 = arith.constant 64 : i32
    %7 = tpu.dynamic_rotate %6 by %c64_i32 dim 1 : vector<2x128xf32>, i32 -> vector<2x128xf32>
    %8 = arith.addf %6, %7 : vector<2x128xf32>
    %c32_i32 = arith.constant 32 : i32
    %9 = tpu.dynamic_rotate %8 by %c32_i32 dim 1 : vector<2x128xf32>, i32 -> vector<2x128xf32>
    %10 = arith.addf %8, %9 : vector<2x128xf32>
    %11 = vector.extract_strided_slice %10 {offsets = [0, 0], sizes = [2, 32], strides = [1, 1]} : vector<2x128xf32> to vector<2x32xf32>
    %c0_3 = arith.constant 0 : index
    %c0_4 = arith.constant 0 : index
    %12 = vector.load %arg3[%c0_3, %c0_4] : memref<1x32xf32, #tpu.memory_space<vmem>>, vector<1x32xf32>
    %13 = vector.broadcast %12 : vector<1x32xf32> to vector<2x32xf32>
    %14 = arith.addf %11, %13 : vector<2x32xf32>
    %15 = arith.negf %14 : vector<2x32xf32>
    %16 = math.exp %15 : vector<2x32xf32>
    %cst = arith.constant 1.000000e+00 : f32
    %17 = vector.broadcast %cst : f32 to vector<2x32xf32>
    %18 = arith.addf %17, %16 : vector<2x32xf32>
    %19 = arith.divf %17, %18 : vector<2x32xf32>
    %c0_5 = arith.constant 0 : index
    %c0_6 = arith.constant 0 : index
    %20 = vector.load %arg4[%c0_5, %c0_6] : memref<2x32xf32, #tpu.memory_space<vmem>>, vector<2x32xf32>
    tpu.vector_store %arg4[%c0_5, %c0_6], %19 {strides = array<i32>} : memref<2x32xf32, #tpu.memory_space<vmem>>, vector<2x32xf32>,
    return
  }
  func.func @transform_0(%arg0: i32) -> (i32, i32) {
    %c0_i32 = arith.constant 0 : i32
    %c0_i32_0 = arith.constant 0 : i32
    return %arg0, %c0_i32 : i32, i32
  }
  func.func @transform_1(%arg0: i32) -> (i32, i32) {
    %c0_i32 = arith.constant 0 : i32
    %c0_i32_0 = arith.constant 0 : i32
    %c0_i32_1 = arith.constant 0 : i32
    return %c0_i32, %c0_i32_0 : i32, i32
  }
  func.func @transform_2(%arg0: i32) -> (i32, i32) {
    %c0_i32 = arith.constant 0 : i32
    %c0_i32_0 = arith.constant 0 : i32
    %c0_i32_1 = arith.constant 0 : i32
    return %c0_i32, %c0_i32_0 : i32, i32
  }
  func.func @transform_3(%arg0: i32) -> (i32, i32) {
    %c0_i32 = arith.constant 0 : i32
    %c0_i32_0 = arith.constant 0 : i32
    return %arg0, %c0_i32 : i32, i32
  }
}

</mosaic_0001>

<llo_original>
// kernel: ar_forward.1
$region0: #{ar_forward.1}
  #allocation0 [shape = 'u32[]', space=smem, size = 0x4, offset = 0x4, fixed_abs, tag = 'smem constant byte address 0x4 - core index']
  #allocation1 [shape = 'u32[144,128]{1,0:T(1,128)}', space=vmem, size = 0x12000, scoped, tag = 'internal scratch']
  %s0 = inlined_call_operand.vmem [shape: f32[2,256], index: 0, kind: input, shape index: {}]
  %s1 = inlined_call_operand.vmem [shape: f32[1,256], index: 1, kind: input, shape index: {}]
  %s2 = inlined_call_operand.vmem [shape: f32[1,32], index: 2, kind: input, shape index: {}]
  %s3 = inlined_call_operand.hbm [shape: f32[2,32], index: 3, kind: output, shape index: {}]
  %s4 = sld [smem:[#allocation0]]
  $region22: #{ar_forward.1} parent=0
    _
  %s6 = ssub.s32 1, %s4
  %s7 = scalar_select 0, %s6, %s4
  $region1: #{ar_forward.1} parent=0
    #allocation2 [shape = 'u8[1024]{0}', space=vmem, size = 0x400, scoped, tag = 'output window, operand 0, single buffered']
    #allocation3 [shape = 's32[1]{0}', space=sflag, size = 0x4, scoped, tag = 'scoped memory for ar_forward.1']
    %8 = vsyncpa [#allocation3], 0
    // Predicated region
    $region2: #{ar_forward.1} parent=1 // pred_check
      _
    $region3: #{ar_forward.1} parent=1 // pred_check_branch
      %10 = sbr.rel (0) target = $region5
    $region4: #{ar_forward.1} parent=1 // pred_region
      _
    $region5: #{ar_forward.1} parent=1 // pred_fallthru
      _
    // Predicated region
    $region6: #{ar_forward.1} parent=1 // pred_check
      _
    $region7: #{ar_forward.1} parent=1 // pred_check_branch
      %12 = sbr.rel (0) target = $region9
    $region8: #{ar_forward.1} parent=1 // pred_region
      _
    $region9: #{ar_forward.1} parent=1 // pred_fallthru
      _
    // Predicated region
    $region10: #{ar_forward.1} parent=1 // pred_check
      _
    $region11: #{ar_forward.1} parent=1 // pred_check_branch
      %14 = sbr.rel (0) target = $region13
    $region12: #{ar_forward.1} parent=1 // pred_region
      _
    $region13: #{ar_forward.1} parent=1 // pred_fallthru
      _
    %v15 = vld [vmem:[%s0] sm:$0xf]
    %v16 = vld [vmem:[%s1] sm:$0x3]
    %v18 = vlaneseq
    %v19 = vshrl.u32 %v18, 7
    %v20 = vsub.s32 0, %v19
    %v21 = vrot.slane %v16, %v20
    %v22 = vlaneseq
    %v23 = vshrl.u32 %v22, 7
    %v24 = vsub.s32 1, %v23
    %v25 = vrot.slane %v16, %v24
    %v26 = vcombine.low %v21, %v25
    %v28 = vunpack.c.l.s4 1983009808
    %v29 = vunpack.c.0.s8 %v28
    %v30 = vlaneseq
    %v31 = vshrl.u32 %v30, 7
    %v32 = vsub.s32 %v29, %v31
    %v33 = vrot.slane %v26, %v32
    %v35 = vmul.f32 %v15, %v33
    %v37 = vrot.slane %v35, 2
    %v39 = vadd.f32 %v35, %v37
    %40 = vrot.lane.b32.xlu0 %v39, 64
    %v41 = vpop.permute.xlu0 %40
    %v42 = vadd.f32 %v39, %v41
    %43 = vrot.lane.b32.xlu0 %v42, 32
    %v44 = vpop.permute.xlu0 %43
    %v45 = vadd.f32 %v42, %v44
    %v46 = vld [vmem:[%s2] sm:$0x1]
    %v48 = vlaneseq
    %v49 = vshrl.u32 %v48, 7
    %v50 = vsub.s32 0, %v49
    %v51 = vrot.slane %v46, %v50
    %v53 = vadd.f32 %v45, %v51
    %v54 = vxor.u32 %v53, 2147483648
    %v55 = vmul.f32 %v54, 1.442695
    %v56 = vpow.pop %v55
    %v57 = vadd.f32 %v56, 1.0
    %v58 = vrcp.pop %v57
    %v59 = vmul.f32 1.0, %v58
    %vm60 = vcmask 254976
    %61 = vst.msk [vmem:[#allocation2] sm:$0x3] %vm60, %v59
    // Predicated region
    $region14: #{ar_forward.1} parent=1 // pred_check
      _
    $region15: #{ar_forward.1} parent=1 // pred_check_branch
      %63 = sbr.rel (0) target = $region17
    $region16: #{ar_forward.1} parent=1 // pred_region
      %s65 = ssub.s32 32, 32
      %66 = vsyncadd [#allocation3], %s65
      %s68 = sshll.u32 [#allocation2], 4
      %s69 = int_to_ptr.vmem [resolvable:$true] %s68
      %71 = dma.vmem_to_hbm [thread:$0]  %s69, 32, %s3, [#allocation3]
    $region17: #{ar_forward.1} parent=1 // pred_fallthru
      _
    // Predicated region
    $region18: #{ar_forward.1} parent=1 // pred_check
      _
    $region19: #{ar_forward.1} parent=1 // pred_check_branch
      %73 = sbr.rel (0) target = $region21
    $region20: #{ar_forward.1} parent=1 // pred_region
      %74 = dma.done [#allocation3], 32
    $region21: #{ar_forward.1} parent=1 // pred_fallthru
      _
    %75 = vsyncpa [#allocation3], 1

</llo_original>
